<compile_context>
chip_gen: v5e
topology: v5e:2x2
jax: 0.10.0
libtpu: 0.0.40
codegen_flags: <defaults>
</compile_context>

<pallas_src>
import functools

import jax
import jax.numpy as jnp
from jax.experimental import pallas as pl
from jax.experimental.pallas import tpu as pltpu

EPS = 1e-5


def _softplus(x):
    # Matches torch.nn.Softplus(beta=1, threshold=20).
    return jnp.where(x > 20.0, x, jnp.log1p(jnp.exp(jnp.minimum(x, 20.0))))


def conv_layer_kernel(idx_ref, bond_ref, self_proj_ref, nbr_proj_ref, w_bond_ref,
                      atom_ref, g1_ref, be1_ref, g2_ref, be2_ref,
                      out_ref, sum_scr, sq_scr, acc_scr, *, n_rows_total):
    """Grid = (2, M): axis 0 is the pass (0 = BN1 stats, 1 = normalize/gate/sum),
    axis 1 is the neighbor slot m (neighbor-major slabs of N rows).

      idx_ref        : (N, 1)  int32   neighbor indices for slot m
      bond_ref       : (N, B)  bf16    bond features for slot m
      self_proj_ref  : (N, 2A) f32     atom @ W_self + fc bias   (resident)
      nbr_proj_ref   : (N, 2A) bf16    atom @ W_nbr              (resident)
      w_bond_ref     : (B, 2A) bf16    bond block of fc_full     (resident)
      atom_ref       : (N, A)  f32     residual input            (resident)
      g1/be1         : (1, 2A) f32     bn1 gamma / beta
      g2/be2         : (1, A)  f32     bn2 gamma / beta
      out_ref        : (N, A)  f32
      sum_scr/sq_scr : (1, 2A) f32     BN1 sum / sum-of-squares accumulators
      acc_scr        : (N, A)  f32     neighbor-sum accumulator
    """
    p = pl.program_id(0)
    m = pl.program_id(1)
    last_m = pl.num_programs(1) - 1

    n_atoms = self_proj_ref.shape[0]
    a_len = out_ref.shape[1]

    @pl.when(jnp.logical_and(p == 0, m == 0))
    def _init_stats():
        sum_scr[...] = jnp.zeros_like(sum_scr)
        sq_scr[...] = jnp.zeros_like(sq_scr)

    @pl.when(jnp.logical_and(p == 1, m == 0))
    def _init_acc():
        acc_scr[...] = jnp.zeros_like(acc_scr)

    # ---- pre-BN activation z for this neighbor slab (recomputed on both passes
    #      so the (N*M, 2A) activation never round-trips through HBM) ----
    # In-kernel gather of the precomputed neighbor projection via a one-hot MXU
    # matmul (exact row gather; keeps the gathered intermediate out of HBM).
    # TODO(synk): switch to jnp.take_along_axis / DMA gather for large N.
    idx_col = idx_ref[...]                                            # (N, 1) i32
    src_ids = jax.lax.broadcasted_iota(jnp.int32, (n_atoms, n_atoms), 1)
    onehot = jnp.where(idx_col == src_ids, 1.0, 0.0).astype(jnp.bfloat16)
    gathered = jnp.dot(onehot, nbr_proj_ref[...],
                       preferred_element_type=jnp.float32)            # (N, 2A) f32
    z_bond = jnp.dot(bond_ref[...], w_bond_ref[...],
                     preferred_element_type=jnp.float32)              # (N, 2A) f32
    z = self_proj_ref[...] + gathered + z_bond                        # (N, 2A) f32

    # ---- pass 0: accumulate BN1 batch statistics over all N*M rows ----
    @pl.when(p == 0)
    def _accumulate_stats():
        sum_scr[...] += jnp.sum(z, axis=0, keepdims=True)
        sq_scr[...] += jnp.sum(z * z, axis=0, keepdims=True)

    # ---- pass 1: BN1-normalize, gate, accumulate the neighbor sum ----
    @pl.when(p == 1)
    def _normalize_gate_accumulate():
        inv_cnt = 1.0 / float(n_rows_total)
        mu = sum_scr[...] * inv_cnt
        # One-pass E[z^2] - E[z]^2 (biased, torch-style).  z is a pre-BN
        # activation with small mean so f32 cancellation is benign; the clamp
        # guards tiny negative round-off.
        var = jnp.maximum(sq_scr[...] * inv_cnt - mu * mu, 0.0)
        scale = g1_ref[...] * jax.lax.rsqrt(var + EPS)
        shift = be1_ref[...] - mu * scale
        zn = z * scale + shift
        nbr_filter = jax.nn.sigmoid(zn[:, :a_len])
        nbr_core = _softplus(zn[:, a_len:])
        acc_scr[...] += nbr_filter * nbr_core

    # ---- finalize: BN2 (batch stats over N atoms) + residual + softplus ----
    @pl.when(jnp.logical_and(p == 1, m == last_m))
    def _finalize():
        s = acc_scr[...]
        mu2 = jnp.mean(s, axis=0, keepdims=True)
        var2 = jnp.mean((s - mu2) ** 2, axis=0, keepdims=True)   # biased var
        s = (s - mu2) * jax.lax.rsqrt(var2 + EPS) * g2_ref[...] + be2_ref[...]
        out_ref[...] = _softplus(atom_ref[...] + s)


def conv_layer_forward(atom_in_fea, nbr_fea, nbr_fea_idx, params):
    """ConvLayer forward (training-mode batch norm) with a Pallas TPU kernel."""
    N, A = atom_in_fea.shape
    M = nbr_fea_idx.shape[1]
    B = nbr_fea.shape[-1]
    two_a = 2 * A
    f32, bf16 = jnp.float32, jnp.bfloat16

    atom_f32 = atom_in_fea.astype(f32)
    atom_bf16 = atom_in_fea.astype(bf16)

    # Split fc_full (out=2A, in=[self A | neighbor A | bond B]) into three GEMMs.
    w = params["fc_w"].astype(f32)                       # (2A, 2A+B)
    w_self = w[:, :A].T.astype(bf16)                     # (A, 2A)
    w_nbr = w[:, A:2 * A].T.astype(bf16)                 # (A, 2A)
    w_bond = w[:, 2 * A:].T.astype(bf16)                 # (B, 2A)
    bias = params["fc_b"].reshape(1, two_a).astype(f32)

    # Per-atom projections computed ONCE at (N, A)x(A, 2A) instead of per (n, m).
    self_proj = jnp.dot(atom_bf16, w_self, preferred_element_type=f32) + bias   # (N, 2A) f32
    nbr_proj = jnp.dot(atom_bf16, w_nbr, preferred_element_type=f32).astype(bf16)  # (N, 2A) bf16

    # Neighbor-major layout: each grid step m consumes one contiguous (N, .) slab,
    # so the sum over M neighbors is a pure VALU accumulation in VMEM scratch.
    bond_t = jnp.transpose(nbr_fea.astype(bf16), (1, 0, 2))                   # (M, N, B)
    idx_t = jnp.transpose(nbr_fea_idx.astype(jnp.int32), (1, 0))[:, :, None]  # (M, N, 1)

    g1 = params["bn1_g"].reshape(1, two_a).astype(f32)
    be1 = params["bn1_b"].reshape(1, two_a).astype(f32)
    g2 = params["bn2_g"].reshape(1, A).astype(f32)
    be2 = params["bn2_b"].reshape(1, A).astype(f32)

    kernel = functools.partial(conv_layer_kernel, n_rows_total=N * M)

    grid_spec = pltpu.PrefetchScalarGridSpec(
        num_scalar_prefetch=0,
        grid=(2, M),   # (pass, neighbor slot); both carry accumulators -> arbitrary
        in_specs=[
            pl.BlockSpec((None, N, 1), lambda p, m: (m, 0, 0)),   # neighbor idx slab
            pl.BlockSpec((None, N, B), lambda p, m: (m, 0, 0)),   # bond feature slab
            pl.BlockSpec((N, two_a), lambda p, m: (0, 0)),        # self_proj (+bias), resident
            pl.BlockSpec((N, two_a), lambda p, m: (0, 0)),        # nbr_proj, resident
            pl.BlockSpec((B, two_a), lambda p, m: (0, 0)),        # W_bond, resident
            pl.BlockSpec((N, A), lambda p, m: (0, 0)),            # residual atom features
            pl.BlockSpec((1, two_a), lambda p, m: (0, 0)),        # bn1 gamma
            pl.BlockSpec((1, two_a), lambda p, m: (0, 0)),        # bn1 beta
            pl.BlockSpec((1, A), lambda p, m: (0, 0)),            # bn2 gamma
            pl.BlockSpec((1, A), lambda p, m: (0, 0)),            # bn2 beta
        ],
        out_specs=pl.BlockSpec((N, A), lambda p, m: (0, 0)),
        scratch_shapes=[
            pltpu.VMEM((1, two_a), f32),   # sum(z)
            pltpu.VMEM((1, two_a), f32),   # sum(z*z)
            pltpu.VMEM((N, A), f32),       # neighbor-sum accumulator
        ],
    )

    return pl.pallas_call(
        kernel,
        out_shape=jax.ShapeDtypeStruct((N, A), f32),
        grid_spec=grid_spec,
        compiler_params=pltpu.CompilerParams(
            dimension_semantics=("arbitrary", "arbitrary")),
    )(idx_t, bond_t, self_proj, nbr_proj, w_bond, atom_f32, g1, be1, g2, be2)


def conv_layer_reference(atom_in_fea, nbr_fea, nbr_fea_idx, params):
    """Pure-JAX f32 reference mirroring the PyTorch module (training-mode BN)."""
    N, A = atom_in_fea.shape
    M = nbr_fea_idx.shape[1]
    atom_nbr_fea = atom_in_fea[nbr_fea_idx, :]
    total = jnp.concatenate(
        [jnp.broadcast_to(atom_in_fea[:, None, :], (N, M, A)),
         atom_nbr_fea, nbr_fea], axis=2)
    z = total @ params["fc_w"].T + params["fc_b"]
    zf = z.reshape(-1, 2 * A)
    mu, var = jnp.mean(zf, 0), jnp.var(zf, 0)
    zf = (zf - mu) / jnp.sqrt(var + EPS) * params["bn1_g"] + params["bn1_b"]
    z = zf.reshape(N, M, 2 * A)
    filt, core = jax.nn.sigmoid(z[..., :A]), _softplus(z[..., A:])
    s = jnp.sum(filt * core, axis=1)
    mu2, var2 = jnp.mean(s, 0), jnp.var(s, 0)
    s = (s - mu2) / jnp.sqrt(var2 + EPS) * params["bn2_g"] + params["bn2_b"]
    return _softplus(atom_in_fea + s)


if __name__ == "__main__":
    # Small shapes consistent with the module's forward signature.
    # (N is the *total* atoms in the batch, so real batches just mean larger N.)
    N, M = 16, 8                 # atoms, max neighbors
    atom_fea_len = 32            # A
    nbr_fea_len = 32             # B

    key = jax.random.PRNGKey(0)
    k1, k2, k3, k4, k5 = jax.random.split(key, 5)

    atom_in_fea = jax.random.normal(k1, (N, atom_fea_len), dtype=jnp.float32)
    nbr_fea = jax.random.normal(k2, (N, M, nbr_fea_len), dtype=jnp.float32)
    nbr_fea_idx = jax.random.randint(k3, (N, M), 0, N, dtype=jnp.int32)

    d_in = 2 * atom_fea_len + nbr_fea_len
    d_out = 2 * atom_fea_len
    bound = 1.0 / jnp.sqrt(jnp.float32(d_in))
    params = {
        # nn.Linear(2A+B, 2A): weight (out, in), bias (out,)
        "fc_w": jax.random.uniform(k4, (d_out, d_in), jnp.float32, -bound, bound),
        "fc_b": jax.random.uniform(k5, (d_out,), jnp.float32, -bound, bound),
        # BatchNorm1d defaults: weight=1, bias=0
        "bn1_g": jnp.ones((d_out,), jnp.float32),
        "bn1_b": jnp.zeros((d_out,), jnp.float32),
        "bn2_g": jnp.ones((atom_fea_len,), jnp.float32),
        "bn2_b": jnp.zeros((atom_fea_len,), jnp.float32),
    }

    out = conv_layer_forward(atom_in_fea, nbr_fea, nbr_fea_idx, params)
    out = jax.block_until_ready(out)

    ref = conv_layer_reference(atom_in_fea, nbr_fea, nbr_fea_idx, params)
    assert out.shape == (N, atom_fea_len)
    # Tolerance reflects bf16 MXU operands vs. the all-f32 reference.
    max_err = float(jnp.max(jnp.abs(out - ref)))
    assert jnp.allclose(out, ref, atol=5e-2, rtol=5e-2), \
        f"mismatch vs reference (max abs err {max_err})"

    print("KERNEL_OK")
</pallas_src>

<mosaic_0001>
module attributes {stable_mosaic.version = 11 : i64} {
  func.func @conv_layer_kernel(%arg0: i32, %arg1: i32, %arg2: memref<1x16x1xi32, #tpu.memory_space<vmem>>, %arg3: memref<1x16x32xbf16, #tpu.memory_space<vmem>>, %arg4: memref<16x64xf32, #tpu.memory_space<vmem>>, %arg5: memref<16x64xbf16, #tpu.memory_space<vmem>>, %arg6: memref<32x64xbf16, #tpu.memory_space<vmem>>, %arg7: memref<16x32xf32, #tpu.memory_space<vmem>>, %arg8: memref<1x64xf32, #tpu.memory_space<vmem>>, %arg9: memref<1x64xf32, #tpu.memory_space<vmem>>, %arg10: memref<1x32xf32, #tpu.memory_space<vmem>>, %arg11: memref<1x32xf32, #tpu.memory_space<vmem>>, %arg12: memref<16x32xf32, #tpu.memory_space<vmem>>, %arg13: memref<1x64xf32, #tpu.memory_space<vmem>>, %arg14: memref<1x64xf32, #tpu.memory_space<vmem>>, %arg15: memref<16x32xf32, #tpu.memory_space<vmem>>) attributes {dimension_semantics = [#tpu.dimension_semantics<arbitrary>, #tpu.dimension_semantics<arbitrary>], iteration_bounds = array<i64: 2, 8>, scalar_prefetch = 0 : i64, scratch_operands = 3 : i64, tpu.core_type = #tpu.core_type<tc>, window_params = [{transform_indices = @transform_0, window_bounds = array<i64: 1, 16, 1>}, {transform_indices = @transform_1, window_bounds = array<i64: 1, 16, 32>}, {pipeline_mode = #tpu.pipeline_mode<synchronous>, transform_indices = @transform_2, window_bounds = array<i64: 16, 64>}, {pipeline_mode = #tpu.pipeline_mode<synchronous>, transform_indices = @transform_3, window_bounds = array<i64: 16, 64>}, {pipeline_mode = #tpu.pipeline_mode<synchronous>, transform_indices = @transform_4, window_bounds = array<i64: 32, 64>}, {pipeline_mode = #tpu.pipeline_mode<synchronous>, transform_indices = @transform_5, window_bounds = array<i64: 16, 32>}, {pipeline_mode = #tpu.pipeline_mode<synchronous>, transform_indices = @transform_6, window_bounds = array<i64: 1, 64>}, {pipeline_mode = #tpu.pipeline_mode<synchronous>, transform_indices = @transform_7, window_bounds = array<i64: 1, 64>}, {pipeline_mode = #tpu.pipeline_mode<synchronous>, transform_indices = @transform_8, window_bounds = array<i64: 1, 32>}, {pipeline_mode = #tpu.pipeline_mode<synchronous>, transform_indices = @transform_9, window_bounds = array<i64: 1, 32>}, {pipeline_mode = #tpu.pipeline_mode<synchronous>, transform_indices = @transform_10, window_bounds = array<i64: 16, 32>}]} {
    %c0_i32 = arith.constant 0 : i32
    %0 = arith.cmpi eq, %arg0, %c0_i32 : i32
    %c0_i32_0 = arith.constant 0 : i32
    %1 = arith.cmpi eq, %arg1, %c0_i32_0 : i32
    %2 = arith.andi %0, %1 : i1
    %3 = arith.extui %2 : i1 to i32
    %c0_i32_1 = arith.constant 0 : i32
    %4 = arith.cmpi ne, %3, %c0_i32_1 : i32
    scf.if %4 {
      %cst_24 = arith.constant 0.000000e+00 : f32
      %39 = vector.broadcast %cst_24 : f32 to vector<1x64xf32>
      %c0_25 = arith.constant 0 : index
      %c0_26 = arith.constant 0 : index
      %40 = vector.load %arg13[%c0_25, %c0_26] : memref<1x64xf32, #tpu.memory_space<vmem>>, vector<1x64xf32>
      tpu.vector_store %arg13[%c0_25, %c0_26], %39 {strides = array<i32>} : memref<1x64xf32, #tpu.memory_space<vmem>>, vector<1x64xf32>,
      %cst_27 = arith.constant 0.000000e+00 : f32
      %41 = vector.broadcast %cst_27 : f32 to vector<1x64xf32>
      %c0_28 = arith.constant 0 : index
      %c0_29 = arith.constant 0 : index
      %42 = vector.load %arg14[%c0_28, %c0_29] : memref<1x64xf32, #tpu.memory_space<vmem>>, vector<1x64xf32>
      tpu.vector_store %arg14[%c0_28, %c0_29], %41 {strides = array<i32>} : memref<1x64xf32, #tpu.memory_space<vmem>>, vector<1x64xf32>,
    } else {
    }
    %c1_i32 = arith.constant 1 : i32
    %5 = arith.cmpi eq, %arg0, %c1_i32 : i32
    %c0_i32_2 = arith.constant 0 : i32
    %6 = arith.cmpi eq, %arg1, %c0_i32_2 : i32
    %7 = arith.andi %5, %6 : i1
    %8 = arith.extui %7 : i1 to i32
    %c0_i32_3 = arith.constant 0 : i32
    %9 = arith.cmpi ne, %8, %c0_i32_3 : i32
    scf.if %9 {
      %cst_24 = arith.constant 0.000000e+00 : f32
      %39 = vector.broadcast %cst_24 : f32 to vector<16x32xf32>
      %c0_25 = arith.constant 0 : index
      %c0_26 = arith.constant 0 : index
      %40 = vector.load %arg15[%c0_25, %c0_26] : memref<16x32xf32, #tpu.memory_space<vmem>>, vector<16x32xf32>
      tpu.vector_store %arg15[%c0_25, %c0_26], %39 {strides = array<i32>} : memref<16x32xf32, #tpu.memory_space<vmem>>, vector<16x32xf32>,
    } else {
    }
    %c0 = arith.constant 0 : index
    %c0_4 = arith.constant 0 : index
    %c0_5 = arith.constant 0 : index
    %10 = vector.load %arg2[%c0, %c0_4, %c0_5] : memref<1x16x1xi32, #tpu.memory_space<vmem>>, vector<1x16x1xi32>
    %11 = vector.shape_cast %10 : vector<1x16x1xi32> to vector<16x1xi32>
    %12 = tpu.iota {dimensions = array<i32: 1>} : vector<16x16xi32>
    %13 = vector.broadcast %11 : vector<16x1xi32> to vector<16x16xi32>
    %14 = arith.cmpi eq, %13, %12 : vector<16x16xi32>
    %cst = arith.constant 1.000000e+00 : f32
    %cst_6 = arith.constant 0.000000e+00 : f32
    %15 = vector.broadcast %cst : f32 to vector<16x16xf32>
    %16 = vector.broadcast %cst_6 : f32 to vector<16x16xf32>
    %17 = arith.select %14, %15, %16 : vector<16x16xi1>, vector<16x16xf32>
    %18 = arith.truncf %17 : vector<16x16xf32> to vector<16x16xbf16>
    %c0_7 = arith.constant 0 : index
    %c0_8 = arith.constant 0 : index
    %19 = vector.load %arg5[%c0_7, %c0_8] : memref<16x64xbf16, #tpu.memory_space<vmem>>, vector<16x64xbf16>
    %cst_9 = arith.constant dense<0.000000e+00> : vector<16x64xf32>
    %20 = tpu.matmul %18, %19, %cst_9 {dimension_numbers = #tpu.dot_dimension_numbers<[1], [0], [0], [1], [0, 0, 1, 1], [], []>} : vector<16x16xbf16>, vector<16x64xbf16>, vector<16x64xf32> -> vector<16x64xf32>
    %c0_10 = arith.constant 0 : index
    %c0_11 = arith.constant 0 : index
    %c0_12 = arith.constant 0 : index
    %21 = vector.load %arg3[%c0_10, %c0_11, %c0_12] : memref<1x16x32xbf16, #tpu.memory_space<vmem>>, vector<1x16x32xbf16>
    %22 = vector.shape_cast %21 : vector<1x16x32xbf16> to vector<16x32xbf16>
    %c0_13 = arith.constant 0 : index
    %c0_14 = arith.constant 0 : index
    %23 = vector.load %arg6[%c0_13, %c0_14] : memref<32x64xbf16, #tpu.memory_space<vmem>>, vector<32x64xbf16>
    %cst_15 = arith.constant dense<0.000000e+00> : vector<16x64xf32>
    %24 = tpu.matmul %22, %23, %cst_15 {dimension_numbers = #tpu.dot_dimension_numbers<[1], [0], [0], [1], [0, 0, 1, 1], [], []>} : vector<16x32xbf16>, vector<32x64xbf16>, vector<16x64xf32> -> vector<16x64xf32>
    %c0_16 = arith.constant 0 : index
    %c0_17 = arith.constant 0 : index
    %25 = vector.load %arg4[%c0_16, %c0_17] : memref<16x64xf32, #tpu.memory_space<vmem>>, vector<16x64xf32>
    %26 = arith.addf %25, %20 : vector<16x64xf32>
    %27 = arith.addf %26, %24 : vector<16x64xf32>
    %c0_i32_18 = arith.constant 0 : i32
    %28 = arith.cmpi eq, %arg0, %c0_i32_18 : i32
    %29 = arith.extui %28 : i1 to i32
    %c0_i32_19 = arith.constant 0 : i32
    %30 = arith.cmpi ne, %29, %c0_i32_19 : i32
    scf.if %30 {
      %c0_24 = arith.constant 0 : index
      %c0_25 = arith.constant 0 : index
      %39 = vector.load %arg13[%c0_24, %c0_25] : memref<1x64xf32, #tpu.memory_space<vmem>>, vector<1x64xf32>
      %cst_26 = arith.constant dense<0.000000e+00> : vector<64xf32>
      %40 = vector.multi_reduction <add>, %27, %cst_26 [0] : vector<16x64xf32> to vector<64xf32>
      %41 = vector.shape_cast %40 : vector<64xf32> to vector<1x64xf32>
      %42 = arith.addf %39, %41 : vector<1x64xf32>
      %c0_27 = arith.constant 0 : index
      %c0_28 = arith.constant 0 : index
      %43 = vector.load %arg13[%c0_27, %c0_28] : memref<1x64xf32, #tpu.memory_space<vmem>>, vector<1x64xf32>
      tpu.vector_store %arg13[%c0_27, %c0_28], %42 {strides = array<i32>} : memref<1x64xf32, #tpu.memory_space<vmem>>, vector<1x64xf32>,
      %c0_29 = arith.constant 0 : index
      %c0_30 = arith.constant 0 : index
      %44 = vector.load %arg14[%c0_29, %c0_30] : memref<1x64xf32, #tpu.memory_space<vmem>>, vector<1x64xf32>
      %45 = arith.mulf %27, %27 : vector<16x64xf32>
      %cst_31 = arith.constant dense<0.000000e+00> : vector<64xf32>
      %46 = vector.multi_reduction <add>, %45, %cst_31 [0] : vector<16x64xf32> to vector<64xf32>
      %47 = vector.shape_cast %46 : vector<64xf32> to vector<1x64xf32>
      %48 = arith.addf %44, %47 : vector<1x64xf32>
      %c0_32 = arith.constant 0 : index
      %c0_33 = arith.constant 0 : index
      %49 = vector.load %arg14[%c0_32, %c0_33] : memref<1x64xf32, #tpu.memory_space<vmem>>, vector<1x64xf32>
      tpu.vector_store %arg14[%c0_32, %c0_33], %48 {strides = array<i32>} : memref<1x64xf32, #tpu.memory_space<vmem>>, vector<1x64xf32>,
    } else {
    }
    %c1_i32_20 = arith.constant 1 : i32
    %31 = arith.cmpi eq, %arg0, %c1_i32_20 : i32
    %32 = arith.extui %31 : i1 to i32
    %c0_i32_21 = arith.constant 0 : i32
    %33 = arith.cmpi ne, %32, %c0_i32_21 : i32
    scf.if %33 {
      %c0_24 = arith.constant 0 : index
      %c0_25 = arith.constant 0 : index
      %39 = vector.load %arg13[%c0_24, %c0_25] : memref<1x64xf32, #tpu.memory_space<vmem>>, vector<1x64xf32>
      %cst_26 = arith.constant 7.812500e-03 : f32
      %40 = vector.broadcast %cst_26 : f32 to vector<1x64xf32>
      %41 = arith.mulf %39, %40 : vector<1x64xf32>
      %c0_27 = arith.constant 0 : index
      %c0_28 = arith.constant 0 : index
      %42 = vector.load %arg14[%c0_27, %c0_28] : memref<1x64xf32, #tpu.memory_space<vmem>>, vector<1x64xf32>
      %cst_29 = arith.constant 7.812500e-03 : f32
      %43 = vector.broadcast %cst_29 : f32 to vector<1x64xf32>
      %44 = arith.mulf %42, %43 : vector<1x64xf32>
      %45 = arith.mulf %41, %41 : vector<1x64xf32>
      %46 = arith.subf %44, %45 : vector<1x64xf32>
      %cst_30 = arith.constant 0.000000e+00 : f32
      %47 = vector.broadcast %cst_30 : f32 to vector<1x64xf32>
      %48 = arith.maximumf %46, %47 : vector<1x64xf32>
      %c0_31 = arith.constant 0 : index
      %c0_32 = arith.constant 0 : index
      %49 = vector.load %arg8[%c0_31, %c0_32] : memref<1x64xf32, #tpu.memory_space<vmem>>, vector<1x64xf32>
      %cst_33 = arith.constant 9.99999974E-6 : f32
      %50 = vector.broadcast %cst_33 : f32 to vector<1x64xf32>
      %51 = arith.addf %48, %50 : vector<1x64xf32>
      %52 = math.rsqrt %51 : vector<1x64xf32>
      %53 = arith.mulf %49, %52 : vector<1x64xf32>
      %c0_34 = arith.constant 0 : index
      %c0_35 = arith.constant 0 : index
      %54 = vector.load %arg9[%c0_34, %c0_35] : memref<1x64xf32, #tpu.memory_space<vmem>>, vector<1x64xf32>
      %55 = arith.mulf %41, %53 : vector<1x64xf32>
      %56 = arith.subf %54, %55 : vector<1x64xf32>
      %57 = vector.broadcast %53 : vector<1x64xf32> to vector<16x64xf32>
      %58 = arith.mulf %27, %57 : vector<16x64xf32>
      %59 = vector.broadcast %56 : vector<1x64xf32> to vector<16x64xf32>
      %60 = arith.addf %58, %59 : vector<16x64xf32>
      %61 = vector.extract_strided_slice %60 {offsets = [0, 0], sizes = [16, 32], strides = [1, 1]} : vector<16x64xf32> to vector<16x32xf32>
      %62 = arith.negf %61 : vector<16x32xf32>
      %63 = math.exp %62 : vector<16x32xf32>
      %cst_36 = arith.constant 1.000000e+00 : f32
      %64 = vector.broadcast %cst_36 : f32 to vector<16x32xf32>
      %65 = arith.addf %64, %63 : vector<16x32xf32>
      %66 = arith.divf %64, %65 : vector<16x32xf32>
      %67 = vector.extract_strided_slice %60 {offsets = [0, 32], sizes = [16, 32], strides = [1, 1]} : vector<16x64xf32> to vector<16x32xf32>
      %cst_37 = arith.constant 2.000000e+01 : f32
      %68 = vector.broadcast %cst_37 : f32 to vector<16x32xf32>
      %69 = arith.cmpf ogt, %67, %68 : vector<16x32xf32>
      %cst_38 = arith.constant 2.000000e+01 : f32
      %70 = vector.broadcast %cst_38 : f32 to vector<16x32xf32>
      %71 = arith.minimumf %67, %70 : vector<16x32xf32>
      %72 = math.exp %71 : vector<16x32xf32>
      %73 = math.log1p %72 : vector<16x32xf32>
      %74 = arith.select %69, %67, %73 : vector<16x32xi1>, vector<16x32xf32>
      %c0_39 = arith.constant 0 : index
      %c0_40 = arith.constant 0 : index
      %75 = vector.load %arg15[%c0_39, %c0_40] : memref<16x32xf32, #tpu.memory_space<vmem>>, vector<16x32xf32>
      %76 = arith.mulf %66, %74 : vector<16x32xf32>
      %77 = arith.addf %75, %76 : vector<16x32xf32>
      %c0_41 = arith.constant 0 : index
      %c0_42 = arith.constant 0 : index
      %78 = vector.load %arg15[%c0_41, %c0_42] : memref<16x32xf32, #tpu.memory_space<vmem>>, vector<16x32xf32>
      tpu.vector_store %arg15[%c0_41, %c0_42], %77 {strides = array<i32>} : memref<16x32xf32, #tpu.memory_space<vmem>>, vector<16x32xf32>,
    } else {
    }
    %c1_i32_22 = arith.constant 1 : i32
    %34 = arith.cmpi eq, %arg0, %c1_i32_22 : i32
    %c7_i32 = arith.constant 7 : i32
    %35 = arith.cmpi eq, %arg1, %c7_i32 : i32
    %36 = arith.andi %34, %35 : i1
    %37 = arith.extui %36 : i1 to i32
    %c0_i32_23 = arith.constant 0 : i32
    %38 = arith.cmpi ne, %37, %c0_i32_23 : i32
    scf.if %38 {
      %c0_24 = arith.constant 0 : index
      %c0_25 = arith.constant 0 : index
      %39 = vector.load %arg15[%c0_24, %c0_25] : memref<16x32xf32, #tpu.memory_space<vmem>>, vector<16x32xf32>
      %cst_26 = arith.constant dense<0.000000e+00> : vector<32xf32>
      %40 = vector.multi_reduction <add>, %39, %cst_26 [0] : vector<16x32xf32> to vector<32xf32>
      %41 = vector.shape_cast %40 : vector<32xf32> to vector<1x32xf32>
      %cst_27 = arith.constant 1.600000e+01 : f32
      %42 = vector.broadcast %cst_27 : f32 to vector<1x32xf32>
      %43 = arith.divf %41, %42 : vector<1x32xf32>
      %44 = vector.broadcast %43 : vector<1x32xf32> to vector<16x32xf32>
      %45 = arith.subf %39, %44 : vector<16x32xf32>
      %46 = arith.mulf %45, %45 : vector<16x32xf32>
      %cst_28 = arith.constant dense<0.000000e+00> : vector<32xf32>
      %47 = vector.multi_reduction <add>, %46, %cst_28 [0] : vector<16x32xf32> to vector<32xf32>
      %48 = vector.shape_cast %47 : vector<32xf32> to vector<1x32xf32>
      %cst_29 = arith.constant 1.600000e+01 : f32
      %49 = vector.broadcast %cst_29 : f32 to vector<1x32xf32>
      %50 = arith.divf %48, %49 : vector<1x32xf32>
      %51 = vector.broadcast %43 : vector<1x32xf32> to vector<16x32xf32>
      %52 = arith.subf %39, %51 : vector<16x32xf32>
      %cst_30 = arith.constant 9.99999974E-6 : f32
      %53 = vector.broadcast %cst_30 : f32 to vector<1x32xf32>
      %54 = arith.addf %50, %53 : vector<1x32xf32>
      %55 = math.rsqrt %54 : vector<1x32xf32>
      %56 = vector.broadcast %55 : vector<1x32xf32> to vector<16x32xf32>
      %57 = arith.mulf %52, %56 : vector<16x32xf32>
      %c0_31 = arith.constant 0 : index
      %c0_32 = arith.constant 0 : index
      %58 = vector.load %arg10[%c0_31, %c0_32] : memref<1x32xf32, #tpu.memory_space<vmem>>, vector<1x32xf32>
      %59 = vector.broadcast %58 : vector<1x32xf32> to vector<16x32xf32>
      %60 = arith.mulf %57, %59 : vector<16x32xf32>
      %c0_33 = arith.constant 0 : index
      %c0_34 = arith.constant 0 : index
      %61 = vector.load %arg11[%c0_33, %c0_34] : memref<1x32xf32, #tpu.memory_space<vmem>>, vector<1x32xf32>
      %62 = vector.broadcast %61 : vector<1x32xf32> to vector<16x32xf32>
      %63 = arith.addf %60, %62 : vector<16x32xf32>
      %c0_35 = arith.constant 0 : index
      %c0_36 = arith.constant 0 : index
      %64 = vector.load %arg7[%c0_35, %c0_36] : memref<16x32xf32, #tpu.memory_space<vmem>>, vector<16x32xf32>
      %65 = arith.addf %64, %63 : vector<16x32xf32>
      %cst_37 = arith.constant 2.000000e+01 : f32
      %66 = vector.broadcast %cst_37 : f32 to vector<16x32xf32>
      %67 = arith.cmpf ogt, %65, %66 : vector<16x32xf32>
      %cst_38 = arith.constant 2.000000e+01 : f32
      %68 = vector.broadcast %cst_38 : f32 to vector<16x32xf32>
      %69 = arith.minimumf %65, %68 : vector<16x32xf32>
      %70 = math.exp %69 : vector<16x32xf32>
      %71 = math.log1p %70 : vector<16x32xf32>
      %72 = arith.select %67, %65, %71 : vector<16x32xi1>, vector<16x32xf32>
      %c0_39 = arith.constant 0 : index
      %c0_40 = arith.constant 0 : index
      %73 = vector.load %arg12[%c0_39, %c0_40] : memref<16x32xf32, #tpu.memory_space<vmem>>, vector<16x32xf32>
      tpu.vector_store %arg12[%c0_39, %c0_40], %72 {strides = array<i32>} : memref<16x32xf32, #tpu.memory_space<vmem>>, vector<16x32xf32>,
    } else {
    }
    return
  }
  func.func @transform_0(%arg0: i32, %arg1: i32) -> (i32, i32, i32) {
    %c0_i32 = arith.constant 0 : i32
    %c0_i32_0 = arith.constant 0 : i32
    %c0_i32_1 = arith.constant 0 : i32
    return %arg1, %c0_i32, %c0_i32_0 : i32, i32, i32
  }
  func.func @transform_1(%arg0: i32, %arg1: i32) -> (i32, i32, i32) {
    %c0_i32 = arith.constant 0 : i32
    %c0_i32_0 = arith.constant 0 : i32
    %c0_i32_1 = arith.constant 0 : i32
    return %arg1, %c0_i32, %c0_i32_0 : i32, i32, i32
  }
  func.func @transform_2(%arg0: i32, %arg1: i32) -> (i32, i32) {
    %c0_i32 = arith.constant 0 : i32
    %c0_i32_0 = arith.constant 0 : i32
    %c0_i32_1 = arith.constant 0 : i32
    return %c0_i32, %c0_i32_0 : i32, i32
  }
  func.func @transform_3(%arg0: i32, %arg1: i32) -> (i32, i32) {
    %c0_i32 = arith.constant 0 : i32
    %c0_i32_0 = arith.constant 0 : i32
    %c0_i32_1 = arith.constant 0 : i32
    return %c0_i32, %c0_i32_0 : i32, i32
  }
  func.func @transform_4(%arg0: i32, %arg1: i32) -> (i32, i32) {
    %c0_i32 = arith.constant 0 : i32
    %c0_i32_0 = arith.constant 0 : i32
    %c0_i32_1 = arith.constant 0 : i32
    return %c0_i32, %c0_i32_0 : i32, i32
  }
  func.func @transform_5(%arg0: i32, %arg1: i32) -> (i32, i32) {
    %c0_i32 = arith.constant 0 : i32
    %c0_i32_0 = arith.constant 0 : i32
    %c0_i32_1 = arith.constant 0 : i32
    return %c0_i32, %c0_i32_0 : i32, i32
  }
  func.func @transform_6(%arg0: i32, %arg1: i32) -> (i32, i32) {
    %c0_i32 = arith.constant 0 : i32
    %c0_i32_0 = arith.constant 0 : i32
    %c0_i32_1 = arith.constant 0 : i32
    return %c0_i32, %c0_i32_0 : i32, i32
  }
  func.func @transform_7(%arg0: i32, %arg1: i32) -> (i32, i32) {
    %c0_i32 = arith.constant 0 : i32
    %c0_i32_0 = arith.constant 0 : i32
    %c0_i32_1 = arith.constant 0 : i32
    return %c0_i32, %c0_i32_0 : i32, i32
  }
  func.func @transform_8(%arg0: i32, %arg1: i32) -> (i32, i32) {
    %c0_i32 = arith.constant 0 : i32
    %c0_i32_0 = arith.constant 0 : i32
    %c0_i32_1 = arith.constant 0 : i32
    return %c0_i32, %c0_i32_0 : i32, i32
  }
  func.func @transform_9(%arg0: i32, %arg1: i32) -> (i32, i32) {
    %c0_i32 = arith.constant 0 : i32
    %c0_i32_0 = arith.constant 0 : i32
    %c0_i32_1 = arith.constant 0 : i32
    return %c0_i32, %c0_i32_0 : i32, i32
  }
  func.func @transform_10(%arg0: i32, %arg1: i32) -> (i32, i32) {
    %c0_i32 = arith.constant 0 : i32
    %c0_i32_0 = arith.constant 0 : i32
    %c0_i32_1 = arith.constant 0 : i32
    return %c0_i32, %c0_i32_0 : i32, i32
  }
}

</mosaic_0001>

<llo_original>
// kernel: tpu_custom_call.1
$region0: #{tpu_custom_call.1}
  #allocation0 [shape = 'u32[]', space=smem, size = 0x4, offset = 0x4, fixed_abs, tag = 'smem constant byte address 0x4 - core index']
  #allocation1 [shape = 'u32[72,128]{1,0:T(1,128)}', space=vmem, size = 0x9000, scoped, tag = 'internal scratch']
  #allocation2 [shape = 'f32[1,64]{1,0:T(1,128)}', space=vmem, size = 0x200, scoped, tag = 'scratch operand']
  #allocation3 [shape = 'f32[1,64]{1,0:T(1,128)}', space=vmem, size = 0x200, scoped, tag = 'scratch operand']
  #allocation4 [shape = 'f32[16,32]{1,0:T(8,128)}', space=vmem, size = 0x2000, scoped, tag = 'scratch operand']
  %s0 = inlined_call_operand.vmem [shape: s32[8,16,1], index: 0, kind: input, shape index: {}]
  %s1 = inlined_call_operand.vmem [shape: bf16[8,16,32], index: 1, kind: input, shape index: {}]
  %s2 = inlined_call_operand.vmem [shape: f32[16,64], index: 2, kind: input, shape index: {}]
  %s3 = inlined_call_operand.vmem [shape: bf16[16,64], index: 3, kind: input, shape index: {}]
  %s4 = inlined_call_operand.vmem [shape: bf16[32,64], index: 4, kind: input, shape index: {}]
  %s5 = inlined_call_operand.vmem [shape: f32[16,32], index: 5, kind: input, shape index: {}]
  %s6 = inlined_call_operand.vmem [shape: f32[1,64], index: 6, kind: input, shape index: {}]
  %s7 = inlined_call_operand.vmem [shape: f32[1,64], index: 7, kind: input, shape index: {}]
  %s8 = inlined_call_operand.vmem [shape: f32[1,32], index: 8, kind: input, shape index: {}]
  %s9 = inlined_call_operand.vmem [shape: f32[1,32], index: 9, kind: input, shape index: {}]
  %s10 = inlined_call_operand.hbm [shape: f32[16,32], index: 10, kind: output, shape index: {}]
  %s11 = sld [smem:[#allocation0]]
  $region93: #{tpu_custom_call.1} parent=0
    _
  %s13 = ssub.s32 1, %s11
  %s14 = scalar_select 0, %s13, %s11
  $region1: #{tpu_custom_call.1} parent=0
    #allocation5 [shape = 'u8[8192]{0}', space=vmem, size = 0x2000, scoped, tag = 'output window, operand 0, single buffered']
    #allocation6 [shape = 's32[2]{0}', space=sflag, size = 0x8, scoped, tag = 'scoped memory for tpu_custom_call.1']
    %15 = vsyncpa [#allocation6], 0
    loop: start=0, step=1, limit=18
    $region2: #{tpu_custom_call.1} parent=1 // loop_pre_header
      _
    $region3: #{tpu_custom_call.1} parent=1 // loop_header
      %s17 = sphi 0, %s21
      %p18 = scmp.ge.s32.totalorder %s17, 18
      %s24 = sphi 0, %s36
      %s25 = sphi 0, %s32
      %s26 = sphi 0, %s24
      %s27 = sphi 0, %s25
      %s28 = sphi 0, %s26
      %s29 = sphi 0, %s27
      %s39 = sphi 0, %s41
      %s42 = sphi 0, %s39
      %s43 = sphi 0, %s42
      %s59 = sphi 0, %s43
      %s65 = sphi 0, %s67
      %s68 = sphi 0, %s65
      %s69 = sphi 0, %s68
      %s85 = sphi 0, %s69
      %s89 = sphi 0, %s89
      %s91 = sphi 0, %s89
      %s92 = sphi 0, %s91
      %s106 = sphi 0, %s92
      %s110 = sphi 0, %s110
      %s112 = sphi 0, %s110
      %s113 = sphi 0, %s112
      %s127 = sphi 0, %s113
      %s131 = sphi 0, %s131
      %s133 = sphi 0, %s131
      %s134 = sphi 0, %s133
      %s148 = sphi 0, %s134
      %s152 = sphi 0, %s152
      %s154 = sphi 0, %s152
      %s155 = sphi 0, %s154
      %s169 = sphi 0, %s155
      %s173 = sphi 0, %s173
      %s175 = sphi 0, %s173
      %s176 = sphi 0, %s175
      %s190 = sphi 0, %s176
      %s194 = sphi 0, %s194
      %s196 = sphi 0, %s194
      %s197 = sphi 0, %s196
      %s211 = sphi 0, %s197
      %s215 = sphi 0, %s215
      %s217 = sphi 0, %s215
      %s218 = sphi 0, %s217
      %s232 = sphi 0, %s218
      %s236 = sphi 0, %s236
      %s238 = sphi 0, %s236
      %s239 = sphi 0, %s238
      %s253 = sphi 0, %s239
      %s257 = sphi 0, %s257
      %s259 = sphi 0, %s257
      %s260 = sphi 0, %s259
      %s274 = sphi 0, %s260
    $region4: #{tpu_custom_call.1} parent=1 // loop_header_branch
      %20 = sbr.rel (%p18) target = $region8
    $region5: #{tpu_custom_call.1} parent=1 // loop_body
      %s22 = ssub.s32 %s17, 1
      %s23 = ssub.s32 %s17, 2
      %s30 = sadd.s32 1, %s25
      %p31 = scmp.ge.s32.totalorder %s30, 8
      %s32 = scalar_select %p31, 0, %s30
      %s33 = sadd.s32 1, %s24
      %s34 = scalar_select %p31, %s33, %s24
      %p35 = scmp.ge.s32.totalorder %s34, 2
      %s36 = scalar_select %p35, 0, %s34
      %s37 = ssub.s32 %s25, %s32
      %p38 = scmp.eq.s32.totalorder %s37, 0
      %s40 = sadd.s32 %s39, 1
      %s41 = scalar_select %p38, %s39, %s40
      %p44 = pneg %p38
      %p45 = scmp.eq.s32.totalorder %s17, 15
      %p46 = por %p44, %p45
      %p47 = scmp.ne.s32.totalorder %s39, %s42
      %p48 = scmp.eq.s32.totalorder %s17, 0
      %p49 = por %p47, %p48
      %p50 = scmp.ne.s32.totalorder %s39, %s42
      %p51 = scmp.eq.s32.totalorder %s22, 15
      %p52 = por %p50, %p51
      %p53 = scmp.ne.s32.totalorder %s42, %s43
      %p54 = scmp.eq.s32.totalorder %s22, 0
      %p55 = por %p53, %p54
      %p56 = scmp.ne.s32.totalorder %s42, %s43
      %p57 = scmp.eq.s32.totalorder %s23, 15
      %p58 = por %p56, %p57
      %p60 = scmp.ne.s32.totalorder %s43, %s59
      %p61 = scmp.eq.s32.totalorder %s23, 0
      %p62 = por %p60, %p61
      %s63 = ssub.s32 %s25, %s32
      %p64 = scmp.eq.s32.totalorder %s63, 0
      %s66 = sadd.s32 %s65, 1
      %s67 = scalar_select %p64, %s65, %s66
      %p70 = pneg %p64
      %p71 = scmp.eq.s32.totalorder %s17, 15
      %p72 = por %p70, %p71
      %p73 = scmp.ne.s32.totalorder %s65, %s68
      %p74 = scmp.eq.s32.totalorder %s17, 0
      %p75 = por %p73, %p74
      %p76 = scmp.ne.s32.totalorder %s65, %s68
      %p77 = scmp.eq.s32.totalorder %s22, 15
      %p78 = por %p76, %p77
      %p79 = scmp.ne.s32.totalorder %s68, %s69
      %p80 = scmp.eq.s32.totalorder %s22, 0
      %p81 = por %p79, %p80
      %p82 = scmp.ne.s32.totalorder %s68, %s69
      %p83 = scmp.eq.s32.totalorder %s23, 15
      %p84 = por %p82, %p83
      %p86 = scmp.ne.s32.totalorder %s69, %s85
      %p87 = scmp.eq.s32.totalorder %s23, 0
      %p88 = por %p86, %p87
      %s90 = sadd.s32 %s89, 1
      %p93 = scmp.eq.s32.totalorder %s17, 15
      %p94 = scmp.ne.s32.totalorder %s89, %s91
      %p95 = scmp.eq.s32.totalorder %s17, 0
      %p96 = por %p94, %p95
      %p97 = scmp.ne.s32.totalorder %s89, %s91
      %p98 = scmp.eq.s32.totalorder %s22, 15
      %p99 = por %p97, %p98
      %p100 = scmp.ne.s32.totalorder %s91, %s92
      %p101 = scmp.eq.s32.totalorder %s22, 0
      %p102 = por %p100, %p101
      %p103 = scmp.ne.s32.totalorder %s91, %s92
      %p104 = scmp.eq.s32.totalorder %s23, 15
      %p105 = por %p103, %p104
      %p107 = scmp.ne.s32.totalorder %s92, %s106
      %p108 = scmp.eq.s32.totalorder %s23, 0
      %p109 = por %p107, %p108
      %s111 = sadd.s32 %s110, 1
      %p114 = scmp.eq.s32.totalorder %s17, 15
      %p115 = scmp.ne.s32.totalorder %s110, %s112
      %p116 = scmp.eq.s32.totalorder %s17, 0
      %p117 = por %p115, %p116
      %p118 = scmp.ne.s32.totalorder %s110, %s112
      %p119 = scmp.eq.s32.totalorder %s22, 15
      %p120 = por %p118, %p119
      %p121 = scmp.ne.s32.totalorder %s112, %s113
      %p122 = scmp.eq.s32.totalorder %s22, 0
      %p123 = por %p121, %p122
      %p124 = scmp.ne.s32.totalorder %s112, %s113
      %p125 = scmp.eq.s32.totalorder %s23, 15
      %p126 = por %p124, %p125
      %p128 = scmp.ne.s32.totalorder %s113, %s127
      %p129 = scmp.eq.s32.totalorder %s23, 0
      %p130 = por %p128, %p129
      %s132 = sadd.s32 %s131, 1
      %p135 = scmp.eq.s32.totalorder %s17, 15
      %p136 = scmp.ne.s32.totalorder %s131, %s133
      %p137 = scmp.eq.s32.totalorder %s17, 0
      %p138 = por %p136, %p137
      %p139 = scmp.ne.s32.totalorder %s131, %s133
      %p140 = scmp.eq.s32.totalorder %s22, 15
      %p141 = por %p139, %p140
      %p142 = scmp.ne.s32.totalorder %s133, %s134
      %p143 = scmp.eq.s32.totalorder %s22, 0
      %p144 = por %p142, %p143
      %p145 = scmp.ne.s32.totalorder %s133, %s134
      %p146 = scmp.eq.s32.totalorder %s23, 15
      %p147 = por %p145, %p146
      %p149 = scmp.ne.s32.totalorder %s134, %s148
      %p150 = scmp.eq.s32.totalorder %s23, 0
      %p151 = por %p149, %p150
      %s153 = sadd.s32 %s152, 1
      %p156 = scmp.eq.s32.totalorder %s17, 15
      %p157 = scmp.ne.s32.totalorder %s152, %s154
      %p158 = scmp.eq.s32.totalorder %s17, 0
      %p159 = por %p157, %p158
      %p160 = scmp.ne.s32.totalorder %s152, %s154
      %p161 = scmp.eq.s32.totalorder %s22, 15
      %p162 = por %p160, %p161
      %p163 = scmp.ne.s32.totalorder %s154, %s155
      %p164 = scmp.eq.s32.totalorder %s22, 0
      %p165 = por %p163, %p164
      %p166 = scmp.ne.s32.totalorder %s154, %s155
      %p167 = scmp.eq.s32.totalorder %s23, 15
      %p168 = por %p166, %p167
      %p170 = scmp.ne.s32.totalorder %s155, %s169
      %p171 = scmp.eq.s32.totalorder %s23, 0
      %p172 = por %p170, %p171
      %s174 = sadd.s32 %s173, 1
      %p177 = scmp.eq.s32.totalorder %s17, 15
      %p178 = scmp.ne.s32.totalorder %s173, %s175
      %p179 = scmp.eq.s32.totalorder %s17, 0
      %p180 = por %p178, %p179
      %p181 = scmp.ne.s32.totalorder %s173, %s175
      %p182 = scmp.eq.s32.totalorder %s22, 15
      %p183 = por %p181, %p182
      %p184 = scmp.ne.s32.totalorder %s175, %s176
      %p185 = scmp.eq.s32.totalorder %s22, 0
      %p186 = por %p184, %p185
      %p187 = scmp.ne.s32.totalorder %s175, %s176
      %p188 = scmp.eq.s32.totalorder %s23, 15
      %p189 = por %p187, %p188
      %p191 = scmp.ne.s32.totalorder %s176, %s190
      %p192 = scmp.eq.s32.totalorder %s23, 0
      %p193 = por %p191, %p192
      %s195 = sadd.s32 %s194, 1
      %p198 = scmp.eq.s32.totalorder %s17, 15
      %p199 = scmp.ne.s32.totalorder %s194, %s196
      %p200 = scmp.eq.s32.totalorder %s17, 0
      %p201 = por %p199, %p200
      %p202 = scmp.ne.s32.totalorder %s194, %s196
      %p203 = scmp.eq.s32.totalorder %s22, 15
      %p204 = por %p202, %p203
      %p205 = scmp.ne.s32.totalorder %s196, %s197
      %p206 = scmp.eq.s32.totalorder %s22, 0
      %p207 = por %p205, %p206
      %p208 = scmp.ne.s32.totalorder %s196, %s197
      %p209 = scmp.eq.s32.totalorder %s23, 15
      %p210 = por %p208, %p209
      %p212 = scmp.ne.s32.totalorder %s197, %s211
      %p213 = scmp.eq.s32.totalorder %s23, 0
      %p214 = por %p212, %p213
      %s216 = sadd.s32 %s215, 1
      %p219 = scmp.eq.s32.totalorder %s17, 15
      %p220 = scmp.ne.s32.totalorder %s215, %s217
      %p221 = scmp.eq.s32.totalorder %s17, 0
      %p222 = por %p220, %p221
      %p223 = scmp.ne.s32.totalorder %s215, %s217
      %p224 = scmp.eq.s32.totalorder %s22, 15
      %p225 = por %p223, %p224
      %p226 = scmp.ne.s32.totalorder %s217, %s218
      %p227 = scmp.eq.s32.totalorder %s22, 0
      %p228 = por %p226, %p227
      %p229 = scmp.ne.s32.totalorder %s217, %s218
      %p230 = scmp.eq.s32.totalorder %s23, 15
      %p231 = por %p229, %p230
      %p233 = scmp.ne.s32.totalorder %s218, %s232
      %p234 = scmp.eq.s32.totalorder %s23, 0
      %p235 = por %p233, %p234
      %s237 = sadd.s32 %s236, 1
      %p240 = scmp.eq.s32.totalorder %s17, 15
      %p241 = scmp.ne.s32.totalorder %s236, %s238
      %p242 = scmp.eq.s32.totalorder %s17, 0
      %p243 = por %p241, %p242
      %p244 = scmp.ne.s32.totalorder %s236, %s238
      %p245 = scmp.eq.s32.totalorder %s22, 15
      %p246 = por %p244, %p245
      %p247 = scmp.ne.s32.totalorder %s238, %s239
      %p248 = scmp.eq.s32.totalorder %s22, 0
      %p249 = por %p247, %p248
      %p250 = scmp.ne.s32.totalorder %s238, %s239
      %p251 = scmp.eq.s32.totalorder %s23, 15
      %p252 = por %p250, %p251
      %p254 = scmp.ne.s32.totalorder %s239, %s253
      %p255 = scmp.eq.s32.totalorder %s23, 0
      %p256 = por %p254, %p255
      %s258 = sadd.s32 %s257, 1
      %p261 = scmp.eq.s32.totalorder %s17, 15
      %p262 = scmp.ne.s32.totalorder %s257, %s259
      %p263 = scmp.eq.s32.totalorder %s17, 0
      %p264 = por %p262, %p263
      %p265 = scmp.ne.s32.totalorder %s257, %s259
      %p266 = scmp.eq.s32.totalorder %s22, 15
      %p267 = por %p265, %p266
      %p268 = scmp.ne.s32.totalorder %s259, %s260
      %p269 = scmp.eq.s32.totalorder %s22, 0
      %p270 = por %p268, %p269
      %p271 = scmp.ne.s32.totalorder %s259, %s260
      %p272 = scmp.eq.s32.totalorder %s23, 15
      %p273 = por %p271, %p272
      %p275 = scmp.ne.s32.totalorder %s260, %s274
      %p276 = scmp.eq.s32.totalorder %s23, 0
      %p277 = por %p275, %p276
      %p278 = scmp.le.s32.totalorder 1, %s17
      %p279 = scmp.lt.s32.totalorder %s17, 17
      %p280 = pnand %p278, %p279
      %p281 = pneg %p280
      // Predicated region
      $region9: #{tpu_custom_call.1} parent=5 // pred_check
        _
      $region10: #{tpu_custom_call.1} parent=5 // pred_check_branch
        %283 = sbr.rel (%p280) target = $region12
      $region11: #{tpu_custom_call.1} parent=5 // pred_region
        %s284 = ssub.s32 %s17, 1
        // Predicated region
        $region13: #{tpu_custom_call.1} parent=11 // pred_check
          %p285 = pneg %p102
        $region14: #{tpu_custom_call.1} parent=11 // pred_check_branch
          %287 = sbr.rel (%p285) target = $region16
        $region15: #{tpu_custom_call.1} parent=11 // pred_region
          _
        $region16: #{tpu_custom_call.1} parent=11 // pred_fallthru
          _
        // Predicated region
        $region17: #{tpu_custom_call.1} parent=11 // pred_check
          %p288 = pneg %p123
        $region18: #{tpu_custom_call.1} parent=11 // pred_check_branch
          %290 = sbr.rel (%p288) target = $region20
        $region19: #{tpu_custom_call.1} parent=11 // pred_region
          _
        $region20: #{tpu_custom_call.1} parent=11 // pred_fallthru
          _
        // Predicated region
        $region21: #{tpu_custom_call.1} parent=11 // pred_check
          %p291 = pneg %p144
        $region22: #{tpu_custom_call.1} parent=11 // pred_check_branch
          %293 = sbr.rel (%p291) target = $region24
        $region23: #{tpu_custom_call.1} parent=11 // pred_region
          _
        $region24: #{tpu_custom_call.1} parent=11 // pred_fallthru
          _
        // Predicated region
        $region25: #{tpu_custom_call.1} parent=11 // pred_check
          %p294 = pneg %p165
        $region26: #{tpu_custom_call.1} parent=11 // pred_check_branch
          %296 = sbr.rel (%p294) target = $region28
        $region27: #{tpu_custom_call.1} parent=11 // pred_region
          _
        $region28: #{tpu_custom_call.1} parent=11 // pred_fallthru
          _
        // Predicated region
        $region29: #{tpu_custom_call.1} parent=11 // pred_check
          %p297 = pneg %p186
        $region30: #{tpu_custom_call.1} parent=11 // pred_check_branch
          %299 = sbr.rel (%p297) target = $region32
        $region31: #{tpu_custom_call.1} parent=11 // pred_region
          _
        $region32: #{tpu_custom_call.1} parent=11 // pred_fallthru
          _
        // Predicated region
        $region33: #{tpu_custom_call.1} parent=11 // pred_check
          %p300 = pneg %p207
        $region34: #{tpu_custom_call.1} parent=11 // pred_check_branch
          %302 = sbr.rel (%p300) target = $region36
        $region35: #{tpu_custom_call.1} parent=11 // pred_region
          _
        $region36: #{tpu_custom_call.1} parent=11 // pred_fallthru
          _
        // Predicated region
        $region37: #{tpu_custom_call.1} parent=11 // pred_check
          %p303 = pneg %p228
        $region38: #{tpu_custom_call.1} parent=11 // pred_check_branch
          %305 = sbr.rel (%p303) target = $region40
        $region39: #{tpu_custom_call.1} parent=11 // pred_region
          _
        $region40: #{tpu_custom_call.1} parent=11 // pred_fallthru
          _
        // Predicated region
        $region41: #{tpu_custom_call.1} parent=11 // pred_check
          %p306 = pneg %p249
        $region42: #{tpu_custom_call.1} parent=11 // pred_check_branch
          %308 = sbr.rel (%p306) target = $region44
        $region43: #{tpu_custom_call.1} parent=11 // pred_region
          _
        $region44: #{tpu_custom_call.1} parent=11 // pred_fallthru
          _
      $region12: #{tpu_custom_call.1} parent=5 // pred_fallthru
        _
      %p309 = scmp.lt.s32.totalorder %s17, 16
      // Predicated region
      $region45: #{tpu_custom_call.1} parent=5 // pred_check
        %p310 = pneg %p309
      $region46: #{tpu_custom_call.1} parent=5 // pred_check_branch
        %312 = sbr.rel (%p310) target = $region48
      $region47: #{tpu_custom_call.1} parent=5 // pred_region
        // Predicated region
        $region49: #{tpu_custom_call.1} parent=47 // pred_check
          %p313 = pneg %p49
        $region50: #{tpu_custom_call.1} parent=47 // pred_check_branch
          %315 = sbr.rel (%p313) target = $region52
        $region51: #{tpu_custom_call.1} parent=47 // pred_region
          %p316 = scmp.lt.s32.totalorder %s25, 7
          %s317 = scalar_select %p316, %s25, 7
          %s318 = smul.addr %s317, 2
          %s319 = smul.addr %s318, 8
          %s320 = scalar_lea.vmem %s0, %s319
        $region52: #{tpu_custom_call.1} parent=47 // pred_fallthru
          _
        // Predicated region
        $region53: #{tpu_custom_call.1} parent=47 // pred_check
          %p321 = pneg %p75
        $region54: #{tpu_custom_call.1} parent=47 // pred_check_branch
          %323 = sbr.rel (%p321) target = $region56
        $region55: #{tpu_custom_call.1} parent=47 // pred_region
          %p324 = scmp.lt.s32.totalorder %s25, 7
          %s325 = scalar_select %p324, %s25, 7
          %s326 = smul.addr %s325, 2
          %s327 = smul.addr %s326, 4
          %s328 = scalar_lea.vmem %s1, %s327
        $region56: #{tpu_custom_call.1} parent=47 // pred_fallthru
          _
      $region48: #{tpu_custom_call.1} parent=5 // pred_fallthru
        _
      %p329 = scmp.le.s32.totalorder 1, %s17
      %p330 = scmp.lt.s32.totalorder %s17, 17
      %p331 = pnand %p329, %p330
      %p332 = pneg %p331
      // Predicated region
      $region57: #{tpu_custom_call.1} parent=5 // pred_check
        _
      $region58: #{tpu_custom_call.1} parent=5 // pred_check_branch
        %334 = sbr.rel (%p331) target = $region60
      $region59: #{tpu_custom_call.1} parent=5 // pred_region
        %s335 = ssub.s32 %s17, 1
        %p336 = scmp.lt.s32.totalorder %s27, 7
        %s337 = scalar_select %p336, %s27, 7
        %s338 = smul.addr %s337, 2
        %s339 = smul.addr %s338, 8
        %s340 = scalar_lea.vmem %s0, %s339
        %p341 = pneg %p55
        %p342 = pneg %p52
        %p343 = scmp.lt.s32.totalorder %s27, 7
        %s344 = scalar_select %p343, %s27, 7
        %s345 = smul.addr %s344, 2
        %s346 = smul.addr %s345, 4
        %s347 = scalar_lea.vmem %s1, %s346
        %p348 = pneg %p81
        %p349 = pneg %p78
        %p350 = pneg %p102
        %p351 = pneg %p99
        %p352 = pneg %p123
        %p353 = pneg %p120
        %p354 = pneg %p144
        %p355 = pneg %p141
        %p356 = pneg %p165
        %p357 = pneg %p162
        %p358 = pneg %p186
        %p359 = pneg %p183
        %p360 = pneg %p207
        %p361 = pneg %p204
        %p362 = pneg %p228
        %p363 = pneg %p225
        %p364 = pneg %p249
        %p365 = pneg %p246
        %p366 = pneg %p270
        %p367 = pneg %p267
        %p368 = scmp.lt.s32.totalorder %s27, 7
        %s369 = scalar_select %p368, %s27, 7
        %s370 = smul.addr %s369, 2
        %s371 = smul.addr %s370, 8
        %s372 = scalar_lea.vmem %s0, %s371
        %p373 = scmp.lt.s32.totalorder %s27, 7
        %s374 = scalar_select %p373, %s27, 7
        %s375 = smul.addr %s374, 2
        %s376 = smul.addr %s375, 4
        %s377 = scalar_lea.vmem %s1, %s376
        %p379 = scmp.eq.s32.totalorder %s26, 0
        %p380 = scmp.eq.s32.totalorder %s27, 0
        %p381 = pnand %p379, %p380
        %p382 = pneg %p381
        // Predicated region
        $region61: #{tpu_custom_call.1} parent=59 // pred_check
          _
        $region62: #{tpu_custom_call.1} parent=59 // pred_check_branch
          %384 = sbr.rel (%p381) target = $region64
        $region63: #{tpu_custom_call.1} parent=59 // pred_region
          %vm385 = vcmask 516096
          %386 = vst.msk [vmem:[#allocation2] sm:$0x1] %vm385, 0.0
          %387 = vst.msk [vmem:[#allocation3] sm:$0x1] %vm385, 0.0
        $region64: #{tpu_custom_call.1} parent=59 // pred_fallthru
          _
        %p388 = scmp.eq.s32.totalorder %s26, 1
        %p389 = pnand %p388, %p380
        %p390 = pneg %p389
        // Predicated region
        $region65: #{tpu_custom_call.1} parent=59 // pred_check
          _
        $region66: #{tpu_custom_call.1} parent=59 // pred_check_branch
          %392 = sbr.rel (%p389) target = $region68
        $region67: #{tpu_custom_call.1} parent=59 // pred_region
          %vm393 = vcmask 261120
          %394 = vst.msk [vmem:[#allocation4] sm:$0xff] %vm393, 0.0
          %395 = vst.msk [vmem:[#allocation4 + $0x8] sm:$0xff] %vm393, 0.0
        $region68: #{tpu_custom_call.1} parent=59 // pred_fallthru
          _
        %v396 = vld [vmem:[%s372] sm:$0xff]
        %v397 = vld [vmem:[%s372 + $0x8] sm:$0xff]
        %v398 = vlaneseq
        %v399 = vand.u32 %v398, 127
        %400 = vset.pattern.permute.xlu0 0
        %401 = vperm.xlu0 %400, %v396
        %v402 = vpop.permute.xlu0 %401
        %403 = vset.pattern.permute.xlu0 0
        %404 = vperm.xlu0 %403, %v397
        %v405 = vpop.permute.xlu0 %404
        %vm406 = vcmp.eq.s32.totalorder %v402, %v399
        %vm407 = vcmp.eq.s32.totalorder %v405, %v399
        %v408 = vsel %vm406, 1.0, 0.0
        %v409 = vsel %vm407, 1.0, 0.0
        %v410 = vpack.c.bf16 %v409, %v408
        %v411 = vld [vmem:[%s3] sm:$0xf]
        %v412 = vld [vmem:[%s3 + $0x4] sm:$0xf]
        %v415 = vunpack.c.l.b16 %v411
        %v416 = vunpack.c.l.b16 %v412
        %v417 = vpack.c.b16 %v416, %v415
        %vm419 = vcmask 130048
        %v421 = vsel %vm419, %v410, 0
        %423 = vmatpush.bf16.msra.mxu0 0
        %424 = vmatpush.bf16.msra.mxu0 0
        %425 = vmatpush.bf16.msra.mxu0 0
        %426 = vmatpush.bf16.msra.mxu0 0
        %427 = vmatpush.bf16.msra.mxu0 0
        %428 = vmatpush.bf16.msra.mxu0 0
        %429 = vmatpush.bf16.msra.mxu0 0
        %430 = vmatpush.bf16.msra.mxu0 %v417
        %431 = vmatmul.bf16.gmra.mxu0 %v421
        %v432 = vpop.f32.mrf.mxu0
        %v433 = vadd.f32 0.0, %v432
        %v434 = vpop.f32.mrf.mxu0
        %v435 = vadd.f32 0.0, %v434
        %436 = vdwg.mxu0
        %v437 = vld [vmem:[%s377] sm:$0xf]
        %v438 = vld [vmem:[%s377 + $0x4] sm:$0xf]
        %v439 = vld [vmem:[%s4] sm:$0xf]
        %v440 = vld [vmem:[%s4 + $0x4] sm:$0xf]
        %v441 = vld [vmem:[%s4 + $0x8] sm:$0xf]
        %v442 = vld [vmem:[%s4 + $0xc] sm:$0xf]
        %v445 = vunpack.c.l.b16 %v437
        %v446 = vunpack.c.l.b16 %v438
        %v447 = vpack.c.b16 %v446, %v445
        %v452 = vunpack.c.l.b16 %v439
        %v453 = vunpack.c.l.b16 %v440
        %v454 = vunpack.c.l.b16 %v441
        %v455 = vunpack.c.l.b16 %v442
        %v456 = vpack.c.b16 %v453, %v452
        %v457 = vpack.c.b16 %v455, %v454
        %vm460 = vcmask 261120
        %v462 = vsel %vm460, %v447, 0
        %464 = vmatpush.bf16.msra.mxu0 0
        %465 = vmatpush.bf16.msra.mxu0 0
        %466 = vmatpush.bf16.msra.mxu0 0
        %467 = vmatpush.bf16.msra.mxu0 0
        %468 = vmatpush.bf16.msra.mxu0 0
        %469 = vmatpush.bf16.msra.mxu0 0
        %470 = vmatpush.bf16.msra.mxu0 %v457
        %471 = vmatpush.bf16.msra.mxu0 %v456
        %472 = vmatmul.bf16.gmra.mxu0 %v462
        %v473 = vpop.f32.mrf.mxu0
        %v474 = vadd.f32 0.0, %v473
        %v475 = vpop.f32.mrf.mxu0
        %v476 = vadd.f32 0.0, %v475
        %477 = vdwg.mxu0
        %v478 = vld [vmem:[%s2] sm:$0xff]
        %v479 = vld [vmem:[%s2 + $0x8] sm:$0xff]
        %v480 = vadd.f32 %v478, %v433
        %v481 = vadd.f32 %v479, %v435
        %v482 = vadd.f32 %v480, %v474
        %v483 = vadd.f32 %v481, %v476
        // Predicated region
        $region69: #{tpu_custom_call.1} parent=59 // pred_check
          %p484 = pneg %p379
        $region70: #{tpu_custom_call.1} parent=59 // pred_check_branch
          %486 = sbr.rel (%p484) target = $region72
        $region71: #{tpu_custom_call.1} parent=59 // pred_region
          %v487 = vld [vmem:[#allocation2] sm:$0x1]
          %vm488 = vcmask 523264
          %v489 = vsel %vm488, %v482, 0.0
          %v490 = vsel %vm488, %v483, 0.0
          %v491 = vadd.f32 %v489, %v490
          %v492 = vrot.slane %v491, 4
          %v493 = vadd.f32 %v491, %v492
          %v494 = vrot.slane %v493, 2
          %v495 = vadd.f32 %v493, %v494
          %v496 = vrot.slane %v495, 1
          %v497 = vadd.f32 %v495, %v496
          %v498 = vadd.f32 %v487, %v497
          %vm499 = vcmask 516096
          %500 = vst.msk [vmem:[#allocation2] sm:$0x1] %vm499, %v498
          %v501 = vld [vmem:[#allocation3] sm:$0x1]
          %v502 = vmul.f32 %v482, %v482
          %v503 = vmul.f32 %v483, %v483
          %v504 = vsel %vm488, %v502, 0.0
          %v505 = vsel %vm488, %v503, 0.0
          %v506 = vadd.f32 %v504, %v505
          %v507 = vrot.slane %v506, 4
          %v508 = vadd.f32 %v506, %v507
          %v509 = vrot.slane %v508, 2
          %v510 = vadd.f32 %v508, %v509
          %v511 = vrot.slane %v510, 1
          %v512 = vadd.f32 %v510, %v511
          %v513 = vadd.f32 %v501, %v512
          %514 = vst.msk [vmem:[#allocation3] sm:$0x1] %vm499, %v513
        $region72: #{tpu_custom_call.1} parent=59 // pred_fallthru
          _
        // Predicated region
        $region73: #{tpu_custom_call.1} parent=59 // pred_check
          %p515 = pneg %p388
        $region74: #{tpu_custom_call.1} parent=59 // pred_check_branch
          %517 = sbr.rel (%p515) target = $region76
        $region75: #{tpu_custom_call.1} parent=59 // pred_region
          %v518 = vld [vmem:[#allocation2] sm:$0x1]
          %v519 = vmul.f32 %v518, 0.0078125
          %v520 = vld [vmem:[#allocation3] sm:$0x1]
          %v521 = vmul.f32 %v520, 0.0078125
          %v522 = vmul.f32 %v519, %v519
          %v523 = vsub.f32 %v521, %v522
          %v524 = vmax.f32 %v523, 0.0
          %v525 = vld [vmem:[%s6] sm:$0x1]
          %v526 = vadd.f32 %v524, 1e-05
          %v527 = vrsqrt.pop %v526
          %v528 = vmul.f32 %v527, %v526
          %v529 = vmul.f32 %v528, %v527
          %v530 = vmul.f32 0.5, %v529
          %v531 = vsub.f32 1.5, %v530
          %v532 = vmul.f32 %v527, %v531
          %vm533 = vweird.f32 %v526
          %vm534 = vweird.f32 %v527
          %vm535 = vmor %vm533, %vm534
          %v536 = vsel %vm535, %v527, %v532
          %v537 = vmul.f32 %v525, %v536
          %v538 = vld [vmem:[%s7] sm:$0x1]
          %v539 = vmul.f32 %v519, %v537
          %v540 = vsub.f32 %v538, %v539
          %v542 = vperm.slane %v537, 0
          %v544 = vmul.f32 %v482, %v542
          %v545 = vmul.f32 %v483, %v542
          %v547 = vperm.slane %v540, 0
          %v549 = vadd.f32 %v544, %v547
          %v550 = vadd.f32 %v545, %v547
          %v551 = vxor.u32 %v549, 2147483648
          %v552 = vxor.u32 %v550, 2147483648
          %v553 = vmul.f32 %v551, 1.442695
          %v554 = vpow.pop %v553
          %v555 = vmul.f32 %v552, 1.442695
          %v556 = vpow.pop %v555
          %v557 = vadd.f32 %v554, 1.0
          %v558 = vadd.f32 %v556, 1.0
          %v559 = vrcp.pop %v557
          %v560 = vmul.f32 %v557, %v559
          %v561 = vsub.f32 1.0, %v560
          %v562 = vmul.f32 %v559, %v561
          %v563 = vadd.f32 %v559, %v562
          %vm564 = vweird.f32 %v557
          %vm565 = vweird.f32 %v559
          %vm566 = vmor %vm564, %vm565
          %v567 = vsel %vm566, %v559, %v563
          %v568 = vand.u32 2147483647, %v557
          %vm569 = vcmp.eq.f32.partialorder %v568, 8.507059e+37
          %v570 = vand.u32 %v557, 2147483648
          %v571 = vor.u32 1.1754944e-38, %v570
          %v572 = vsel %vm569, %v571, %v567
          %v573 = vmul.f32 1.0, %v572
          %v574 = vrcp.pop %v558
          %v575 = vmul.f32 %v558, %v574
          %v576 = vsub.f32 1.0, %v575
          %v577 = vmul.f32 %v574, %v576
          %v578 = vadd.f32 %v574, %v577
          %vm579 = vweird.f32 %v558
          %vm580 = vweird.f32 %v574
          %vm581 = vmor %vm579, %vm580
          %v582 = vsel %vm581, %v574, %v578
          %v583 = vand.u32 2147483647, %v558
          %vm584 = vcmp.eq.f32.partialorder %v583, 8.507059e+37
          %v585 = vand.u32 %v558, 2147483648
          %v586 = vor.u32 1.1754944e-38, %v585
          %v587 = vsel %vm584, %v586, %v582
          %v588 = vmul.f32 1.0, %v587
          %vm589 = vcmp.gt.f32.partialorder %v549, 20.0
          %vm590 = vcmp.gt.f32.partialorder %v550, 20.0
          %v591 = vmin.f32 %v549, 20.0
          %v592 = vmin.f32 %v550, 20.0
          %v593 = vmul.f32 %v591, 1.442695
          %v594 = vpow.pop %v593
          %v595 = vmul.f32 %v592, 1.442695
          %v596 = vpow.pop %v595
          %v597 = vadd.f32 %v594, 1.0
          %v598 = vlog2.pop %v597
          %v599 = vmul.f32 %v598, 0.6931472
          %v600 = vmul.f32 -0.5, %v594
          %v601 = vadd.f32 %v600, 1.0
          %v602 = vmul.f32 %v601, %v594
          %v603 = vand.u32 2147483647, %v594
          %vm604 = vcmp.lt.f32.partialorder %v603, 0.0004427343
          %v605 = vsel %vm604, %v602, %v599
          %v606 = vadd.f32 %v596, 1.0
          %v607 = vlog2.pop %v606
          %v608 = vmul.f32 %v607, 0.6931472
          %v609 = vmul.f32 -0.5, %v596
          %v610 = vadd.f32 %v609, 1.0
          %v611 = vmul.f32 %v610, %v596
          %v612 = vand.u32 2147483647, %v596
          %vm613 = vcmp.lt.f32.partialorder %v612, 0.0004427343
          %v614 = vsel %vm613, %v611, %v608
          %v615 = vsel %vm589, %v549, %v605
          %v616 = vsel %vm590, %v550, %v614
          %v617 = vld [vmem:[#allocation4] sm:$0xff]
          %v618 = vld [vmem:[#allocation4 + $0x8] sm:$0xff]
          %621 = vrot.lane.b32.xlu0 %v615, 96
          %v622 = vpop.permute.xlu0 %621
          %623 = vrot.lane.b32.xlu0 %v616, 96
          %v624 = vpop.permute.xlu0 %623
          %v627 = vmul.f32 %v573, %v622
          %v628 = vmul.f32 %v588, %v624
          %v629 = vadd.f32 %v617, %v627
          %v630 = vadd.f32 %v618, %v628
          %631 = vst.msk [vmem:[#allocation4] sm:$0xff] %vm460, %v629
          %632 = vst.msk [vmem:[#allocation4 + $0x8] sm:$0xff] %vm460, %v630
        $region76: #{tpu_custom_call.1} parent=59 // pred_fallthru
          _
        %p633 = scmp.eq.s32.totalorder %s27, 7
        %p634 = pnand %p388, %p633
        %p635 = pneg %p634
        // Predicated region
        $region77: #{tpu_custom_call.1} parent=59 // pred_check
          _
        $region78: #{tpu_custom_call.1} parent=59 // pred_check_branch
          %637 = sbr.rel (%p634) target = $region80
        $region79: #{tpu_custom_call.1} parent=59 // pred_region
          %v638 = vld [vmem:[#allocation4] sm:$0xff]
          %v639 = vld [vmem:[#allocation4 + $0x8] sm:$0xff]
          %v640 = vsel %vm460, %v638, 0.0
          %v641 = vsel %vm460, %v639, 0.0
          %v642 = vadd.f32 %v640, %v641
          %v643 = vrot.slane %v642, 4
          %v644 = vadd.f32 %v642, %v643
          %v645 = vrot.slane %v644, 2
          %v646 = vadd.f32 %v644, %v645
          %v647 = vrot.slane %v646, 1
          %v648 = vadd.f32 %v646, %v647
          %v649 = vrcp.pop 16.0
          %v650 = vmul.f32 16.0, %v649
          %v651 = vsub.f32 1.0, %v650
          %v652 = vmul.f32 %v649, %v651
          %v653 = vadd.f32 %v649, %v652
          %vm654 = vweird.f32 %v649
          %v655 = vsel %vm654, %v649, %v653
          %v656 = vmul.f32 %v648, %v655
          %v657 = vsub.f32 %v638, %v656
          %v658 = vsub.f32 %v639, %v656
          %v659 = vmul.f32 %v657, %v657
          %v660 = vmul.f32 %v658, %v658
          %v661 = vsel %vm460, %v659, 0.0
          %v662 = vsel %vm460, %v660, 0.0
          %v663 = vadd.f32 %v661, %v662
          %v664 = vrot.slane %v663, 4
          %v665 = vadd.f32 %v663, %v664
          %v666 = vrot.slane %v665, 2
          %v667 = vadd.f32 %v665, %v666
          %v668 = vrot.slane %v667, 1
          %v669 = vadd.f32 %v667, %v668
          %v670 = vmul.f32 %v669, %v655
          %v671 = vadd.f32 %v670, 1e-05
          %v672 = vrsqrt.pop %v671
          %v673 = vmul.f32 %v672, %v671
          %v674 = vmul.f32 %v673, %v672
          %v675 = vmul.f32 0.5, %v674
          %v676 = vsub.f32 1.5, %v675
          %v677 = vmul.f32 %v672, %v676
          %vm678 = vweird.f32 %v671
          %vm679 = vweird.f32 %v672
          %vm680 = vmor %vm678, %vm679
          %v681 = vsel %vm680, %v672, %v677
          %v682 = vmul.f32 %v657, %v681
          %v683 = vmul.f32 %v658, %v681
          %v684 = vld [vmem:[%s8] sm:$0x1]
          %v686 = vperm.slane %v684, 0
          %v688 = vmul.f32 %v682, %v686
          %v689 = vmul.f32 %v683, %v686
          %v690 = vld [vmem:[%s9] sm:$0x1]
          %v692 = vperm.slane %v690, 0
          %v694 = vadd.f32 %v688, %v692
          %v695 = vadd.f32 %v689, %v692
          %v696 = vld [vmem:[%s5] sm:$0xff]
          %v697 = vld [vmem:[%s5 + $0x8] sm:$0xff]
          %v698 = vadd.f32 %v696, %v694
          %v699 = vadd.f32 %v697, %v695
          %vm700 = vcmp.gt.f32.partialorder %v698, 20.0
          %vm701 = vcmp.gt.f32.partialorder %v699, 20.0
          %v702 = vmin.f32 %v698, 20.0
          %v703 = vmin.f32 %v699, 20.0
          %v704 = vmul.f32 %v702, 1.442695
          %v705 = vpow.pop %v704
          %v706 = vmul.f32 %v703, 1.442695
          %v707 = vpow.pop %v706
          %v708 = vadd.f32 %v705, 1.0
          %v709 = vlog2.pop %v708
          %v710 = vmul.f32 %v709, 0.6931472
          %v711 = vmul.f32 -0.5, %v705
          %v712 = vadd.f32 %v711, 1.0
          %v713 = vmul.f32 %v712, %v705
          %v714 = vand.u32 2147483647, %v705
          %vm715 = vcmp.lt.f32.partialorder %v714, 0.0004427343
          %v716 = vsel %vm715, %v713, %v710
          %v717 = vadd.f32 %v707, 1.0
          %v718 = vlog2.pop %v717
          %v719 = vmul.f32 %v718, 0.6931472
          %v720 = vmul.f32 -0.5, %v707
          %v721 = vadd.f32 %v720, 1.0
          %v722 = vmul.f32 %v721, %v707
          %v723 = vand.u32 2147483647, %v707
          %vm724 = vcmp.lt.f32.partialorder %v723, 0.0004427343
          %v725 = vsel %vm724, %v722, %v719
          %v726 = vsel %vm700, %v698, %v716
          %v727 = vsel %vm701, %v699, %v725
          %728 = vst.msk [vmem:[#allocation5] sm:$0xff] %vm460, %v726
          %729 = vst.msk [vmem:[#allocation5 + $0x8] sm:$0xff] %vm460, %v727
        $region80: #{tpu_custom_call.1} parent=59 // pred_fallthru
          _
        // Predicated region
        $region81: #{tpu_custom_call.1} parent=59 // pred_check
          %p730 = pneg %p267
        $region82: #{tpu_custom_call.1} parent=59 // pred_check_branch
          %732 = sbr.rel (%p730) target = $region84
        $region83: #{tpu_custom_call.1} parent=59 // pred_region
          %734 = vsyncadd [#allocation6], 0
          %s735 = sshll.u32 [#allocation5], 4
          %s736 = int_to_ptr.vmem [resolvable:$true] %s735
          %s737 = sshll.u32 %s10, 4
          %s738 = int_to_ptr.hbm [resolvable:$true] %s737
          %743 = dma.vmem_to_hbm [thread:$0]  %s736, 256, %s738, [#allocation6], 128, 128, 8
        $region84: #{tpu_custom_call.1} parent=59 // pred_fallthru
          _
        // Predicated region
        $region85: #{tpu_custom_call.1} parent=59 // pred_check
          %p744 = pneg %p267
        $region86: #{tpu_custom_call.1} parent=59 // pred_check_branch
          %746 = sbr.rel (%p744) target = $region88
        $region87: #{tpu_custom_call.1} parent=59 // pred_region
          %748 = dma.done [#allocation6], 256
        $region88: #{tpu_custom_call.1} parent=59 // pred_fallthru
          _
      $region60: #{tpu_custom_call.1} parent=5 // pred_fallthru
        _
      %p749 = scmp.le.s32.totalorder 2, %s17
      // Predicated region
      $region89: #{tpu_custom_call.1} parent=5 // pred_check
        %p750 = pneg %p749
      $region90: #{tpu_custom_call.1} parent=5 // pred_check_branch
        %752 = sbr.rel (%p750) target = $region92
      $region91: #{tpu_custom_call.1} parent=5 // pred_region
        %s753 = ssub.s32 %s17, 2
      $region92: #{tpu_custom_call.1} parent=5 // pred_fallthru
        _
    $region6: #{tpu_custom_call.1} parent=1 // loop_footer
      %s21 = sadd.s32 1, %s17
    $region7: #{tpu_custom_call.1} parent=1 // loop_footer_branch
      %16 = sbr.rel target = $region3
    $region8: #{tpu_custom_call.1} parent=1 // loop_exit
      _
    %754 = vsyncpa [#allocation6], 1
    %s755 = scalar_lea.sflag [#allocation6], 1
    %756 = vsyncpa %s755, 1

</llo_original>
